<compile_context>
chip_gen: v7x
topology: tpu7x:2x2x1
jax: 0.10.0
libtpu: 0.0.40
codegen_flags: <defaults>
</compile_context>

<pallas_src>
import math
import functools

import jax
import jax.numpy as jnp
from jax import lax
from jax.experimental import pallas as pl
from jax.experimental.pallas import tpu as pltpu

GLIMPSE = 2
LN_EPS = 1e-6
NEG_INF = -1e30


def _round_up(x, m):
    return ((x + m - 1) // m) * m


def _vmem_limit_bytes():
    # Generation-aware VMEM scope; leave headroom for compiler internal scratch.
    try:
        cap = int(pltpu.get_tpu_info().vmem_capacity_bytes)
    except Exception:
        cap = 128 * 1024 * 1024
    return max(32 * 1024 * 1024, min(cap * 3 // 4, 100 * 1024 * 1024))


def _layer_norm(a, g, b, approx):
    # matches custom PyTorch LayerNorm: unbiased std (N-1), eps added to the std
    mean = jnp.mean(a, axis=-1, keepdims=True)
    c = a - mean
    var = jnp.sum(c * c, axis=-1, keepdims=True) * (1.0 / (a.shape[-1] - 1))
    inv = pl.reciprocal(jnp.sqrt(var) + LN_EPS, approx=approx)
    return g * c * inv + b


def _dot_t(a, b):
    # a @ b.T without materializing a transpose: contract last dim of both
    return lax.dot_general(a, b, (((1,), (1,)), ((), ())),
                           preferred_element_type=jnp.float32)


# ---------------------------------------------------------------------------
# K / V projection kernel: computed once per (batch, kv-tile), NOT per query tile.
# ---------------------------------------------------------------------------
def kv_proj_kernel(x_ref, wk_ref, bk_ref, wv_ref, bv_ref, k_ref, v_ref, *, glimpse):
    x = x_ref[0]                              # (TL, H) f32
    xc = x.astype(wk_ref.dtype)               # compute dtype for MXU operands
    for h in range(glimpse):                  # static unroll over heads
        kh = jnp.dot(xc, wk_ref[h], preferred_element_type=jnp.float32) + bk_ref[h]
        vh = jnp.dot(xc, wv_ref[h], preferred_element_type=jnp.float32) + bv_ref[h]
        k_ref[0, h] = kh.astype(k_ref.dtype)
        v_ref[0, h] = vh.astype(v_ref.dtype)


# ---------------------------------------------------------------------------
# Main SA kernel: attention (with pre-projected K/V) + residual/LN + MLP + residual/LN.
# ---------------------------------------------------------------------------
def sa_kernel(xq_ref, k_ref, v_ref,
              wq_ref, bq_ref, wm_ref, bm_ref,
              g1_ref, be1_ref,
              w1_ref, b1_ref, w2_ref, b2_ref,
              g2_ref, be2_ref,
              o_ref, *, glimpse, seq_len, approx_recip):
    xq = xq_ref[0].astype(jnp.float32)        # (TQ, H) f32 residual stream
    cd = wq_ref.dtype                         # compute dtype for MXU operands
    xq_c = xq.astype(cd)
    tq, H = xq.shape
    hs = H // glimpse
    L_pad = k_ref.shape[2]
    scale = 1.0 / math.sqrt(hs)

    need_mask = seq_len < L_pad               # static (Python) condition
    if need_mask:
        key_valid = lax.broadcasted_iota(jnp.int32, (1, L_pad), 1) < seq_len

    # ---- multi-head attention, per-head accumulation into the merge projection ----
    atted = bm_ref[...]                       # (1, H) f32, broadcasts up
    for h in range(glimpse):                  # static unroll over heads
        qh = jnp.dot(xq_c, wq_ref[h], preferred_element_type=jnp.float32) + bq_ref[h]  # (TQ, hs)
        kh = k_ref[0, h]                      # (L_pad, hs) compute dtype (pre-projected)
        vh = v_ref[0, h]                      # (L_pad, hs)

        s = _dot_t(qh.astype(cd), kh) * scale                 # (TQ, L_pad) f32
        if need_mask:
            s = jnp.where(key_valid, s, NEG_INF)
        s = s - jnp.max(s, axis=-1, keepdims=True)
        p = jnp.exp(s)
        p = p * pl.reciprocal(jnp.sum(p, axis=-1, keepdims=True), approx=approx_recip)

        ho = jnp.dot(p.astype(cd), vh, preferred_element_type=jnp.float32)   # (TQ, hs)
        # concat(heads) @ Wm == sum_h head_h @ Wm[h*hs:(h+1)*hs, :]
        atted = atted + jnp.dot(ho.astype(cd), wm_ref[h],
                                preferred_element_type=jnp.float32)          # (TQ, H)

    # ---- residual + LayerNorm 1 (f32 residual stream) ----
    x1 = _layer_norm(xq + atted, g1_ref[...], be1_ref[...], approx_recip)

    # ---- FCN / MLP (H -> 4H -> H with ReLU) ----
    h1 = jnp.dot(x1.astype(cd), w1_ref[...], preferred_element_type=jnp.float32) + b1_ref[...]
    h1 = jnp.maximum(h1, 0.0)
    mlp_out = jnp.dot(h1.astype(cd), w2_ref[...],
                      preferred_element_type=jnp.float32) + b2_ref[...]

    # ---- residual + LayerNorm 2 (f32) ----
    x2 = _layer_norm(x1 + mlp_out, g2_ref[...], be2_ref[...], approx_recip)

    o_ref[0] = x2.astype(o_ref.dtype)


def sa_forward(x, params, *, glimpse=GLIMPSE, tq=256, fast=False):
    """x: (B, L, H) float32. params: dict of weights (see init_params).

    fast=False: f32 compute, exact reciprocals.
    fast=True : bf16 matmul operands / f32 accumulation, f32 residual stream,
                EUP approx reciprocals.
    """
    B, L, H = x.shape
    assert H % glimpse == 0 and H >= 2
    hs = H // glimpse
    f32 = jnp.float32
    compute_dtype = jnp.bfloat16 if fast else f32
    approx = bool(fast)

    # query tile: multiple of 8; pad the sequence to a whole number of tiles
    tq = max(8, min(tq, _round_up(L, 8)))
    tq = _round_up(tq, 8)
    n_q = pl.cdiv(L, tq)
    L_pad = n_q * tq

    x_f32 = x.astype(f32)
    if L_pad != L:
        x_f32 = jnp.pad(x_f32, ((0, 0), (0, L_pad - L), (0, 0)))

    def heads_cols(w):   # (H, H) -> (G, H, hs): split output columns per head
        return w.reshape(H, glimpse, hs).transpose(1, 0, 2)

    def heads_rows(w):   # (H, H) -> (G, hs, H): split input rows per head (merge proj)
        return w.reshape(glimpse, hs, H)

    def heads_bias(b):   # (1, H) -> (G, 1, hs)
        return b.reshape(glimpse, 1, hs)

    vmem_limit = _vmem_limit_bytes()
    vmem_whole = pl.BlockSpec(memory_space=pltpu.MemorySpace.VMEM)
    cparams = pltpu.CompilerParams(
        dimension_semantics=("parallel", "parallel"),
        vmem_limit_bytes=vmem_limit,
    )

    # ---- step 1: K / V projections (once per (batch, kv-tile)) ----
    wk = heads_cols(params["wk"]).astype(compute_dtype)
    bk = heads_bias(params["bk"]).astype(f32)
    wv = heads_cols(params["wv"]).astype(compute_dtype)
    bv = heads_bias(params["bv"]).astype(f32)

    kv_fn = pl.pallas_call(
        functools.partial(kv_proj_kernel, glimpse=glimpse),
        out_shape=(jax.ShapeDtypeStruct((B, glimpse, L_pad, hs), compute_dtype),
                   jax.ShapeDtypeStruct((B, glimpse, L_pad, hs), compute_dtype)),
        grid=(B, n_q),
        in_specs=[pl.BlockSpec((1, tq, H), lambda b, l: (b, l, 0)),
                  vmem_whole, vmem_whole, vmem_whole, vmem_whole],
        out_specs=(pl.BlockSpec((1, glimpse, tq, hs), lambda b, l: (b, 0, l, 0)),
                   pl.BlockSpec((1, glimpse, tq, hs), lambda b, l: (b, 0, l, 0))),
        compiler_params=cparams,
    )
    k_proj, v_proj = kv_fn(x_f32, wk, bk, wv, bv)

    # ---- step 2: attention + LN + MLP + LN, gridded over (batch, query tile) ----
    weights = [
        heads_cols(params["wq"]).astype(compute_dtype), heads_bias(params["bq"]).astype(f32),
        heads_rows(params["wm"]).astype(compute_dtype), params["bm"].astype(f32),
        params["g1"].astype(f32), params["be1"].astype(f32),
        params["w1"].astype(compute_dtype), params["bb1"].astype(f32),
        params["w2"].astype(compute_dtype), params["bb2"].astype(f32),
        params["g2"].astype(f32), params["be2"].astype(f32),
    ]

    in_specs = [
        pl.BlockSpec((1, tq, H), lambda b, q: (b, q, 0)),                 # query tile (f32)
        pl.BlockSpec((1, glimpse, L_pad, hs), lambda b, q: (b, 0, 0, 0)),  # pre-projected K
        pl.BlockSpec((1, glimpse, L_pad, hs), lambda b, q: (b, 0, 0, 0)),  # pre-projected V
    ] + [vmem_whole] * len(weights)

    kernel = functools.partial(sa_kernel, glimpse=glimpse, seq_len=L, approx_recip=approx)
    fn = pl.pallas_call(
        kernel,
        out_shape=jax.ShapeDtypeStruct((B, L_pad, H), x.dtype),
        grid=(B, n_q),
        in_specs=in_specs,
        out_specs=pl.BlockSpec((1, tq, H), lambda b, q: (b, q, 0)),
        compiler_params=cparams,
    )
    out = fn(x_f32, k_proj, v_proj, *weights)
    if L_pad != L:
        out = out[:, :L, :]
    return out


def init_params(key, H):
    """Deterministic synthetic parameters matching the PyTorch module's shapes."""
    keys = jax.random.split(key, 8)
    s = 0.05

    def w(k, shape):
        return (s * jax.random.normal(k, shape)).astype(jnp.float32)

    params = {
        "wq": w(keys[0], (H, H)), "bq": w(keys[1], (1, H)),
        "wk": w(keys[2], (H, H)), "bk": w(keys[3], (1, H)),
        "wv": w(keys[4], (H, H)), "bv": w(keys[5], (1, H)),
        "wm": w(keys[6], (H, H)), "bm": jnp.zeros((1, H), jnp.float32),
        "g1": jnp.ones((1, H), jnp.float32), "be1": jnp.zeros((1, H), jnp.float32),
        "w1": w(keys[7], (H, 4 * H)), "bb1": jnp.zeros((1, 4 * H), jnp.float32),
        "w2": w(jax.random.fold_in(key, 99), (4 * H, H)),
        "bb2": jnp.zeros((1, H), jnp.float32),
        "g2": jnp.ones((1, H), jnp.float32), "be2": jnp.zeros((1, H), jnp.float32),
    }
    return params


def sa_reference(x, p):
    """Pure-JAX reference matching the PyTorch module (eval mode)."""
    B, L, H = x.shape
    hs = H // GLIMPSE

    def layer_norm(a, g, b):
        mean = jnp.mean(a, axis=-1, keepdims=True)
        var = jnp.sum((a - mean) ** 2, axis=-1, keepdims=True) / (H - 1)
        std = jnp.sqrt(var)
        return g * (a - mean) / (std + LN_EPS) + b

    q = x @ p["wq"] + p["bq"]
    k = x @ p["wk"] + p["bk"]
    v = x @ p["wv"] + p["bv"]

    def split_heads(t):  # (B, L, H) -> (B, G, L, hs)
        return t.reshape(B, L, GLIMPSE, hs).transpose(0, 2, 1, 3)

    qh, kh, vh = split_heads(q), split_heads(k), split_heads(v)
    scores = jnp.einsum("bgqd,bgkd->bgqk", qh, kh) / math.sqrt(hs)
    att = jax.nn.softmax(scores, axis=-1)
    out = jnp.einsum("bgqk,bgkd->bgqd", att, vh)
    out = out.transpose(0, 2, 1, 3).reshape(B, L, H)
    atted = out @ p["wm"] + p["bm"]

    x1 = layer_norm(x + atted, p["g1"], p["be1"])
    h1 = jnp.maximum(x1 @ p["w1"] + p["bb1"], 0.0)
    mlp_out = h1 @ p["w2"] + p["bb2"]
    x2 = layer_norm(x1 + mlp_out, p["g2"], p["be2"])
    return x2


if __name__ == "__main__":
    key = jax.random.PRNGKey(0)
    kx, kp, kx2, kx3 = jax.random.split(key, 4)

    # --- test 1: small shapes, single q-tile, exact f32 path ---
    B, L, H = 2, 8, 32
    x = jax.random.normal(kx, (B, L, H), dtype=jnp.float32)
    params = init_params(kp, H)
    ref = sa_reference(x, params)

    out = jax.block_until_ready(sa_forward(x, params, fast=False))
    assert out.shape == (B, L, H)
    err = float(jnp.max(jnp.abs(out - ref)))
    assert err < 1e-4, err

    # --- test 2: multiple query tiles (grid = (B, L//TQ)), exact f32 path ---
    L2 = 32
    x2 = jax.random.normal(kx2, (B, L2, H), dtype=jnp.float32)
    ref2 = sa_reference(x2, params)
    out2 = jax.block_until_ready(sa_forward(x2, params, tq=8, fast=False))
    err2 = float(jnp.max(jnp.abs(out2 - ref2)))
    assert err2 < 1e-4, err2

    # --- test 3: awkward L (padding + key masking), exact f32 path ---
    L3 = 12
    x3 = jax.random.normal(kx3, (B, L3, H), dtype=jnp.float32)
    ref3 = sa_reference(x3, params)
    out3 = jax.block_until_ready(sa_forward(x3, params, tq=8, fast=False))
    err3 = float(jnp.max(jnp.abs(out3 - ref3)))
    assert err3 < 1e-4, err3

    # --- test 4: fast path (bf16 operands, f32 accumulation/residuals, approx recip) ---
    out_fast = jax.block_until_ready(sa_forward(x, params, fast=True))
    err_fast = float(jnp.max(jnp.abs(out_fast - ref)))
    assert err_fast < 5e-2, err_fast

    print("KERNEL_OK")
</pallas_src>

<mosaic_0001>
module attributes {stable_mosaic.version = 11 : i64} {
  func.func @kv_proj_kernel(%arg0: i32, %arg1: i32, %arg2: memref<1x8x32xf32, #tpu.memory_space<vmem>>, %arg3: memref<2x32x16xf32, #tpu.memory_space<vmem>>, %arg4: memref<2x1x16xf32, #tpu.memory_space<vmem>>, %arg5: memref<2x32x16xf32, #tpu.memory_space<vmem>>, %arg6: memref<2x1x16xf32, #tpu.memory_space<vmem>>, %arg7: memref<1x2x8x16xf32, #tpu.memory_space<vmem>>, %arg8: memref<1x2x8x16xf32, #tpu.memory_space<vmem>>) attributes {dimension_semantics = [#tpu.dimension_semantics<parallel>, #tpu.dimension_semantics<parallel>], iteration_bounds = array<i64: 2, 1>, scalar_prefetch = 0 : i64, scratch_operands = 0 : i64, tpu.core_type = #tpu.core_type<tc>, window_params = [{transform_indices = @transform_0, window_bounds = array<i64: 1, 8, 32>}, {pipeline_mode = #tpu.pipeline_mode<synchronous>, transform_indices = @transform_1, window_bounds = array<i64: 2, 32, 16>}, {pipeline_mode = #tpu.pipeline_mode<synchronous>, transform_indices = @transform_2, window_bounds = array<i64: 2, 1, 16>}, {pipeline_mode = #tpu.pipeline_mode<synchronous>, transform_indices = @transform_3, window_bounds = array<i64: 2, 32, 16>}, {pipeline_mode = #tpu.pipeline_mode<synchronous>, transform_indices = @transform_4, window_bounds = array<i64: 2, 1, 16>}, {transform_indices = @transform_5, window_bounds = array<i64: 1, 2, 8, 16>}, {transform_indices = @transform_6, window_bounds = array<i64: 1, 2, 8, 16>}]} {
    %c0 = arith.constant 0 : index
    %c0_0 = arith.constant 0 : index
    %c0_1 = arith.constant 0 : index
    %0 = vector.load %arg2[%c0, %c0_0, %c0_1] : memref<1x8x32xf32, #tpu.memory_space<vmem>>, vector<1x8x32xf32>
    %1 = vector.shape_cast %0 : vector<1x8x32xf32> to vector<8x32xf32>
    %c0_2 = arith.constant 0 : index
    %c0_3 = arith.constant 0 : index
    %c0_4 = arith.constant 0 : index
    %2 = vector.load %arg3[%c0_2, %c0_3, %c0_4] : memref<2x32x16xf32, #tpu.memory_space<vmem>>, vector<1x32x16xf32>
    %3 = vector.shape_cast %2 : vector<1x32x16xf32> to vector<32x16xf32>
    %cst = arith.constant dense<0.000000e+00> : vector<8x16xf32>
    %4 = tpu.matmul %1, %3, %cst {dimension_numbers = #tpu.dot_dimension_numbers<[1], [0], [0], [1], [0, 0, 1, 1], [], []>} : vector<8x32xf32>, vector<32x16xf32>, vector<8x16xf32> -> vector<8x16xf32>
    %c0_5 = arith.constant 0 : index
    %c0_6 = arith.constant 0 : index
    %c0_7 = arith.constant 0 : index
    %5 = vector.load %arg4[%c0_5, %c0_6, %c0_7] : memref<2x1x16xf32, #tpu.memory_space<vmem>>, vector<1x1x16xf32>
    %6 = vector.shape_cast %5 : vector<1x1x16xf32> to vector<1x16xf32>
    %7 = vector.broadcast %6 : vector<1x16xf32> to vector<8x16xf32>
    %8 = arith.addf %4, %7 : vector<8x16xf32>
    %c0_8 = arith.constant 0 : index
    %c0_9 = arith.constant 0 : index
    %c0_10 = arith.constant 0 : index
    %9 = vector.load %arg5[%c0_8, %c0_9, %c0_10] : memref<2x32x16xf32, #tpu.memory_space<vmem>>, vector<1x32x16xf32>
    %10 = vector.shape_cast %9 : vector<1x32x16xf32> to vector<32x16xf32>
    %cst_11 = arith.constant dense<0.000000e+00> : vector<8x16xf32>
    %11 = tpu.matmul %1, %10, %cst_11 {dimension_numbers = #tpu.dot_dimension_numbers<[1], [0], [0], [1], [0, 0, 1, 1], [], []>} : vector<8x32xf32>, vector<32x16xf32>, vector<8x16xf32> -> vector<8x16xf32>
    %c0_12 = arith.constant 0 : index
    %c0_13 = arith.constant 0 : index
    %c0_14 = arith.constant 0 : index
    %12 = vector.load %arg6[%c0_12, %c0_13, %c0_14] : memref<2x1x16xf32, #tpu.memory_space<vmem>>, vector<1x1x16xf32>
    %13 = vector.shape_cast %12 : vector<1x1x16xf32> to vector<1x16xf32>
    %14 = vector.broadcast %13 : vector<1x16xf32> to vector<8x16xf32>
    %15 = arith.addf %11, %14 : vector<8x16xf32>
    %c0_15 = arith.constant 0 : index
    %c0_16 = arith.constant 0 : index
    %c0_17 = arith.constant 0 : index
    %c0_18 = arith.constant 0 : index
    %16 = vector.load %arg7[%c0_15, %c0_16, %c0_17, %c0_18] : memref<1x2x8x16xf32, #tpu.memory_space<vmem>>, vector<1x1x8x16xf32>
    %17 = vector.shape_cast %16 : vector<1x1x8x16xf32> to vector<8x16xf32>
    %18 = vector.shape_cast %8 : vector<8x16xf32> to vector<1x1x8x16xf32>
    tpu.vector_store %arg7[%c0_15, %c0_16, %c0_17, %c0_18], %18 {strides = array<i32>} : memref<1x2x8x16xf32, #tpu.memory_space<vmem>>, vector<1x1x8x16xf32>,
    %c0_19 = arith.constant 0 : index
    %c0_20 = arith.constant 0 : index
    %c0_21 = arith.constant 0 : index
    %c0_22 = arith.constant 0 : index
    %19 = vector.load %arg8[%c0_19, %c0_20, %c0_21, %c0_22] : memref<1x2x8x16xf32, #tpu.memory_space<vmem>>, vector<1x1x8x16xf32>
    %20 = vector.shape_cast %19 : vector<1x1x8x16xf32> to vector<8x16xf32>
    %21 = vector.shape_cast %15 : vector<8x16xf32> to vector<1x1x8x16xf32>
    tpu.vector_store %arg8[%c0_19, %c0_20, %c0_21, %c0_22], %21 {strides = array<i32>} : memref<1x2x8x16xf32, #tpu.memory_space<vmem>>, vector<1x1x8x16xf32>,
    %c1 = arith.constant 1 : index
    %c0_23 = arith.constant 0 : index
    %c0_24 = arith.constant 0 : index
    %22 = vector.load %arg3[%c1, %c0_23, %c0_24] : memref<2x32x16xf32, #tpu.memory_space<vmem>>, vector<1x32x16xf32>
    %23 = vector.shape_cast %22 : vector<1x32x16xf32> to vector<32x16xf32>
    %cst_25 = arith.constant dense<0.000000e+00> : vector<8x16xf32>
    %24 = tpu.matmul %1, %23, %cst_25 {dimension_numbers = #tpu.dot_dimension_numbers<[1], [0], [0], [1], [0, 0, 1, 1], [], []>} : vector<8x32xf32>, vector<32x16xf32>, vector<8x16xf32> -> vector<8x16xf32>
    %c1_26 = arith.constant 1 : index
    %c0_27 = arith.constant 0 : index
    %c0_28 = arith.constant 0 : index
    %25 = vector.load %arg4[%c1_26, %c0_27, %c0_28] : memref<2x1x16xf32, #tpu.memory_space<vmem>>, vector<1x1x16xf32>
    %26 = vector.shape_cast %25 : vector<1x1x16xf32> to vector<1x16xf32>
    %27 = vector.broadcast %26 : vector<1x16xf32> to vector<8x16xf32>
    %28 = arith.addf %24, %27 : vector<8x16xf32>
    %c1_29 = arith.constant 1 : index
    %c0_30 = arith.constant 0 : index
    %c0_31 = arith.constant 0 : index
    %29 = vector.load %arg5[%c1_29, %c0_30, %c0_31] : memref<2x32x16xf32, #tpu.memory_space<vmem>>, vector<1x32x16xf32>
    %30 = vector.shape_cast %29 : vector<1x32x16xf32> to vector<32x16xf32>
    %cst_32 = arith.constant dense<0.000000e+00> : vector<8x16xf32>
    %31 = tpu.matmul %1, %30, %cst_32 {dimension_numbers = #tpu.dot_dimension_numbers<[1], [0], [0], [1], [0, 0, 1, 1], [], []>} : vector<8x32xf32>, vector<32x16xf32>, vector<8x16xf32> -> vector<8x16xf32>
    %c1_33 = arith.constant 1 : index
    %c0_34 = arith.constant 0 : index
    %c0_35 = arith.constant 0 : index
    %32 = vector.load %arg6[%c1_33, %c0_34, %c0_35] : memref<2x1x16xf32, #tpu.memory_space<vmem>>, vector<1x1x16xf32>
    %33 = vector.shape_cast %32 : vector<1x1x16xf32> to vector<1x16xf32>
    %34 = vector.broadcast %33 : vector<1x16xf32> to vector<8x16xf32>
    %35 = arith.addf %31, %34 : vector<8x16xf32>
    %c0_36 = arith.constant 0 : index
    %c1_37 = arith.constant 1 : index
    %c0_38 = arith.constant 0 : index
    %c0_39 = arith.constant 0 : index
    %36 = vector.load %arg7[%c0_36, %c1_37, %c0_38, %c0_39] : memref<1x2x8x16xf32, #tpu.memory_space<vmem>>, vector<1x1x8x16xf32>
    %37 = vector.shape_cast %36 : vector<1x1x8x16xf32> to vector<8x16xf32>
    %38 = vector.shape_cast %28 : vector<8x16xf32> to vector<1x1x8x16xf32>
    tpu.vector_store %arg7[%c0_36, %c1_37, %c0_38, %c0_39], %38 {strides = array<i32>} : memref<1x2x8x16xf32, #tpu.memory_space<vmem>>, vector<1x1x8x16xf32>,
    %c0_40 = arith.constant 0 : index
    %c1_41 = arith.constant 1 : index
    %c0_42 = arith.constant 0 : index
    %c0_43 = arith.constant 0 : index
    %39 = vector.load %arg8[%c0_40, %c1_41, %c0_42, %c0_43] : memref<1x2x8x16xf32, #tpu.memory_space<vmem>>, vector<1x1x8x16xf32>
    %40 = vector.shape_cast %39 : vector<1x1x8x16xf32> to vector<8x16xf32>
    %41 = vector.shape_cast %35 : vector<8x16xf32> to vector<1x1x8x16xf32>
    tpu.vector_store %arg8[%c0_40, %c1_41, %c0_42, %c0_43], %41 {strides = array<i32>} : memref<1x2x8x16xf32, #tpu.memory_space<vmem>>, vector<1x1x8x16xf32>,
    return
  }
  func.func @transform_0(%arg0: i32, %arg1: i32) -> (i32, i32, i32) {
    %c0_i32 = arith.constant 0 : i32
    %c0_i32_0 = arith.constant 0 : i32
    return %arg0, %arg1, %c0_i32 : i32, i32, i32
  }
  func.func @transform_1(%arg0: i32, %arg1: i32) -> (i32, i32, i32) {
    %c0_i32 = arith.constant 0 : i32
    %c0_i32_0 = arith.constant 0 : i32
    %c0_i32_1 = arith.constant 0 : i32
    %c0_i32_2 = arith.constant 0 : i32
    return %c0_i32, %c0_i32_0, %c0_i32_1 : i32, i32, i32
  }
  func.func @transform_2(%arg0: i32, %arg1: i32) -> (i32, i32, i32) {
    %c0_i32 = arith.constant 0 : i32
    %c0_i32_0 = arith.constant 0 : i32
    %c0_i32_1 = arith.constant 0 : i32
    %c0_i32_2 = arith.constant 0 : i32
    return %c0_i32, %c0_i32_0, %c0_i32_1 : i32, i32, i32
  }
  func.func @transform_3(%arg0: i32, %arg1: i32) -> (i32, i32, i32) {
    %c0_i32 = arith.constant 0 : i32
    %c0_i32_0 = arith.constant 0 : i32
    %c0_i32_1 = arith.constant 0 : i32
    %c0_i32_2 = arith.constant 0 : i32
    return %c0_i32, %c0_i32_0, %c0_i32_1 : i32, i32, i32
  }
  func.func @transform_4(%arg0: i32, %arg1: i32) -> (i32, i32, i32) {
    %c0_i32 = arith.constant 0 : i32
    %c0_i32_0 = arith.constant 0 : i32
    %c0_i32_1 = arith.constant 0 : i32
    %c0_i32_2 = arith.constant 0 : i32
    return %c0_i32, %c0_i32_0, %c0_i32_1 : i32, i32, i32
  }
  func.func @transform_5(%arg0: i32, %arg1: i32) -> (i32, i32, i32, i32) {
    %c0_i32 = arith.constant 0 : i32
    %c0_i32_0 = arith.constant 0 : i32
    %c0_i32_1 = arith.constant 0 : i32
    return %arg0, %c0_i32, %arg1, %c0_i32_0 : i32, i32, i32, i32
  }
  func.func @transform_6(%arg0: i32, %arg1: i32) -> (i32, i32, i32, i32) {
    %c0_i32 = arith.constant 0 : i32
    %c0_i32_0 = arith.constant 0 : i32
    %c0_i32_1 = arith.constant 0 : i32
    return %arg0, %c0_i32, %arg1, %c0_i32_0 : i32, i32, i32, i32
  }
}

</mosaic_0001>

<llo_original>
// kernel: tpu_custom_call.1
$region0: #{tpu_custom_call.1}
  #allocation0 [shape = 'u32[]', space=smem, size = 0x4, offset = 0x4, fixed_abs, tag = 'smem constant byte address 0x4 - core index']
  #allocation1 [shape = 'u32[144,128]{1,0:T(1,128)}', space=vmem, size = 0x12000, scoped, tag = 'internal scratch']
  %s0 = inlined_call_operand.hbm [shape: f32[2,8,32], index: 0, kind: input, shape index: {}]
  %s1 = inlined_call_operand.hbm [shape: f32[2,32,16], index: 1, kind: input, shape index: {}]
  %s2 = inlined_call_operand.hbm [shape: f32[2,1,16], index: 2, kind: input, shape index: {}]
  %s3 = inlined_call_operand.hbm [shape: f32[2,32,16], index: 3, kind: input, shape index: {}]
  %s4 = inlined_call_operand.hbm [shape: f32[2,1,16], index: 4, kind: input, shape index: {}]
  %s5 = inlined_call_operand.hbm [shape: f32[2,2,8,16], index: 5, kind: output, shape index: {0}]
  %s6 = inlined_call_operand.hbm [shape: f32[2,2,8,16], index: 6, kind: output, shape index: {1}]
  %7 = xla_tuple %s5, %s6
  %s8 = sld [smem:[#allocation0]]
  $region81: #{tpu_custom_call.1} parent=0
    _
  %s10 = ssub.s32 1, %s8
  %s11 = scalar_select 0, %s10, %s8
  $region1: #{tpu_custom_call.1} parent=0
    #allocation2 [shape = 'u8[8192]{0}', space=vmem, size = 0x2000, scoped, tag = 'input window, operand 0']
    #allocation3 [shape = 's32[2]{0}', space=sflag, size = 0x8, scoped, tag = 'scoped memory for tpu_custom_call.1']
    #allocation4 [shape = 's32[2]{0}', space=sflag, size = 0x8, scoped, tag = 'scoped memory for tpu_custom_call.1']
    #allocation5 [shape = 'u8[32768]{0}', space=vmem, size = 0x8000, scoped, tag = 'input window, operand 1, single buffered']
    #allocation6 [shape = 's32[1]{0}', space=sflag, size = 0x4, scoped, tag = 'scoped memory for tpu_custom_call.1']
    #allocation7 [shape = 'u8[1024]{0}', space=vmem, size = 0x400, scoped, tag = 'input window, operand 2, single buffered']
    #allocation8 [shape = 'u8[32768]{0}', space=vmem, size = 0x8000, scoped, tag = 'input window, operand 3, single buffered']
    #allocation9 [shape = 's32[1]{0}', space=sflag, size = 0x4, scoped, tag = 'scoped memory for tpu_custom_call.1']
    #allocation10 [shape = 'u8[1024]{0}', space=vmem, size = 0x400, scoped, tag = 'input window, operand 4, single buffered']
    #allocation11 [shape = 'u8[16384]{0}', space=vmem, size = 0x4000, scoped, tag = 'output window, operand 0']
    #allocation12 [shape = 'u8[16384]{0}', space=vmem, size = 0x4000, scoped, tag = 'output window, operand 1']
    #allocation13 [shape = 's32[2]{0}', space=sflag, size = 0x8, scoped, tag = 'scoped memory for tpu_custom_call.1']
    %12 = vsyncpa [#allocation3], 0
    %s13 = scalar_lea.sflag [#allocation3], 1
    %14 = vsyncpa %s13, 0
    %15 = vsyncpa [#allocation6], 0
    %16 = vsyncpa [#allocation9], 0
    %17 = vsyncpa [#allocation4], 0
    %s18 = scalar_lea.sflag [#allocation4], 1
    %19 = vsyncpa %s18, 0
    %20 = vsyncpa [#allocation13], 0
    %s21 = scalar_lea.sflag [#allocation13], 1
    %22 = vsyncpa %s21, 0
    loop: start=0, step=1, limit=4
    $region2: #{tpu_custom_call.1} parent=1 // loop_pre_header
      _
    $region3: #{tpu_custom_call.1} parent=1 // loop_header
      %s24 = sphi 0, %s28
      %p25 = scmp.ge.s32.totalorder %s24, 4
      %s31 = sphi 0, %s43
      %s32 = sphi 0, %s39
      %s33 = sphi 0, %s31
      %s34 = sphi 0, %s32
      %s35 = sphi 0, %s33
      %s36 = sphi 0, %s34
      %s48 = sphi 0, %s50
      %s51 = sphi 0, %s48
      %s52 = sphi 0, %s51
      %s68 = sphi 0, %s52
      %s72 = sphi 0, %s72
      %s74 = sphi 0, %s72
      %s75 = sphi 0, %s74
      %s89 = sphi 0, %s75
      %s93 = sphi 0, %s93
      %s95 = sphi 0, %s93
      %s96 = sphi 0, %s95
      %s110 = sphi 0, %s96
      %s114 = sphi 0, %s114
      %s116 = sphi 0, %s114
      %s117 = sphi 0, %s116
      %s131 = sphi 0, %s117
      %s135 = sphi 0, %s135
      %s137 = sphi 0, %s135
      %s138 = sphi 0, %s137
      %s152 = sphi 0, %s138
      %s160 = sphi 0, %s162
      %s163 = sphi 0, %s160
      %s164 = sphi 0, %s163
      %s180 = sphi 0, %s164
      %s188 = sphi 0, %s190
      %s191 = sphi 0, %s188
      %s192 = sphi 0, %s191
      %s208 = sphi 0, %s192
    $region4: #{tpu_custom_call.1} parent=1 // loop_header_branch
      %27 = sbr.rel (%p25) target = $region8
    $region5: #{tpu_custom_call.1} parent=1 // loop_body
      %s29 = ssub.s32 %s24, 1
      %s30 = ssub.s32 %s24, 2
      %s37 = sadd.s32 1, %s32
      %p38 = scmp.ge.s32.totalorder %s37, 1
      %s39 = scalar_select %p38, 0, %s37
      %s40 = sadd.s32 1, %s31
      %s41 = scalar_select %p38, %s40, %s31
      %p42 = scmp.ge.s32.totalorder %s41, 2
      %s43 = scalar_select %p42, 0, %s41
      %s44 = ssub.s32 %s31, %s43
      %s45 = ssub.s32 %s32, %s39
      %s46 = sor.u32 %s44, %s45
      %p47 = scmp.eq.s32.totalorder %s46, 0
      %s49 = sadd.s32 %s48, 1
      %s50 = scalar_select %p47, %s48, %s49
      %p53 = pneg %p47
      %p54 = scmp.eq.s32.totalorder %s24, 1
      %p55 = por %p53, %p54
      %p56 = scmp.ne.s32.totalorder %s48, %s51
      %p57 = scmp.eq.s32.totalorder %s24, 0
      %p58 = por %p56, %p57
      %p59 = scmp.ne.s32.totalorder %s48, %s51
      %p60 = scmp.eq.s32.totalorder %s29, 1
      %p61 = por %p59, %p60
      %p62 = scmp.ne.s32.totalorder %s51, %s52
      %p63 = scmp.eq.s32.totalorder %s29, 0
      %p64 = por %p62, %p63
      %p65 = scmp.ne.s32.totalorder %s51, %s52
      %p66 = scmp.eq.s32.totalorder %s30, 1
      %p67 = por %p65, %p66
      %p69 = scmp.ne.s32.totalorder %s52, %s68
      %p70 = scmp.eq.s32.totalorder %s30, 0
      %p71 = por %p69, %p70
      %s73 = sadd.s32 %s72, 1
      %p76 = scmp.eq.s32.totalorder %s24, 1
      %p77 = scmp.ne.s32.totalorder %s72, %s74
      %p78 = scmp.eq.s32.totalorder %s24, 0
      %p79 = por %p77, %p78
      %p80 = scmp.ne.s32.totalorder %s72, %s74
      %p81 = scmp.eq.s32.totalorder %s29, 1
      %p82 = por %p80, %p81
      %p83 = scmp.ne.s32.totalorder %s74, %s75
      %p84 = scmp.eq.s32.totalorder %s29, 0
      %p85 = por %p83, %p84
      %p86 = scmp.ne.s32.totalorder %s74, %s75
      %p87 = scmp.eq.s32.totalorder %s30, 1
      %p88 = por %p86, %p87
      %p90 = scmp.ne.s32.totalorder %s75, %s89
      %p91 = scmp.eq.s32.totalorder %s30, 0
      %p92 = por %p90, %p91
      %s94 = sadd.s32 %s93, 1
      %p97 = scmp.eq.s32.totalorder %s24, 1
      %p98 = scmp.ne.s32.totalorder %s93, %s95
      %p99 = scmp.eq.s32.totalorder %s24, 0
      %p100 = por %p98, %p99
      %p101 = scmp.ne.s32.totalorder %s93, %s95
      %p102 = scmp.eq.s32.totalorder %s29, 1
      %p103 = por %p101, %p102
      %p104 = scmp.ne.s32.totalorder %s95, %s96
      %p105 = scmp.eq.s32.totalorder %s29, 0
      %p106 = por %p104, %p105
      %p107 = scmp.ne.s32.totalorder %s95, %s96
      %p108 = scmp.eq.s32.totalorder %s30, 1
      %p109 = por %p107, %p108
      %p111 = scmp.ne.s32.totalorder %s96, %s110
      %p112 = scmp.eq.s32.totalorder %s30, 0
      %p113 = por %p111, %p112
      %s115 = sadd.s32 %s114, 1
      %p118 = scmp.eq.s32.totalorder %s24, 1
      %p119 = scmp.ne.s32.totalorder %s114, %s116
      %p120 = scmp.eq.s32.totalorder %s24, 0
      %p121 = por %p119, %p120
      %p122 = scmp.ne.s32.totalorder %s114, %s116
      %p123 = scmp.eq.s32.totalorder %s29, 1
      %p124 = por %p122, %p123
      %p125 = scmp.ne.s32.totalorder %s116, %s117
      %p126 = scmp.eq.s32.totalorder %s29, 0
      %p127 = por %p125, %p126
      %p128 = scmp.ne.s32.totalorder %s116, %s117
      %p129 = scmp.eq.s32.totalorder %s30, 1
      %p130 = por %p128, %p129
      %p132 = scmp.ne.s32.totalorder %s117, %s131
      %p133 = scmp.eq.s32.totalorder %s30, 0
      %p134 = por %p132, %p133
      %s136 = sadd.s32 %s135, 1
      %p139 = scmp.eq.s32.totalorder %s24, 1
      %p140 = scmp.ne.s32.totalorder %s135, %s137
      %p141 = scmp.eq.s32.totalorder %s24, 0
      %p142 = por %p140, %p141
      %p143 = scmp.ne.s32.totalorder %s135, %s137
      %p144 = scmp.eq.s32.totalorder %s29, 1
      %p145 = por %p143, %p144
      %p146 = scmp.ne.s32.totalorder %s137, %s138
      %p147 = scmp.eq.s32.totalorder %s29, 0
      %p148 = por %p146, %p147
      %p149 = scmp.ne.s32.totalorder %s137, %s138
      %p150 = scmp.eq.s32.totalorder %s30, 1
      %p151 = por %p149, %p150
      %p153 = scmp.ne.s32.totalorder %s138, %s152
      %p154 = scmp.eq.s32.totalorder %s30, 0
      %p155 = por %p153, %p154
      %s156 = ssub.s32 %s31, %s43
      %s157 = ssub.s32 %s32, %s39
      %s158 = sor.u32 %s156, %s157
      %p159 = scmp.eq.s32.totalorder %s158, 0
      %s161 = sadd.s32 %s160, 1
      %s162 = scalar_select %p159, %s160, %s161
      %p165 = pneg %p159
      %p166 = scmp.eq.s32.totalorder %s24, 1
      %p167 = por %p165, %p166
      %p168 = scmp.ne.s32.totalorder %s160, %s163
      %p169 = scmp.eq.s32.totalorder %s24, 0
      %p170 = por %p168, %p169
      %p171 = scmp.ne.s32.totalorder %s160, %s163
      %p172 = scmp.eq.s32.totalorder %s29, 1
      %p173 = por %p171, %p172
      %p174 = scmp.ne.s32.totalorder %s163, %s164
      %p175 = scmp.eq.s32.totalorder %s29, 0
      %p176 = por %p174, %p175
      %p177 = scmp.ne.s32.totalorder %s163, %s164
      %p178 = scmp.eq.s32.totalorder %s30, 1
      %p179 = por %p177, %p178
      %p181 = scmp.ne.s32.totalorder %s164, %s180
      %p182 = scmp.eq.s32.totalorder %s30, 0
      %p183 = por %p181, %p182
      %s184 = ssub.s32 %s31, %s43
      %s185 = ssub.s32 %s32, %s39
      %s186 = sor.u32 %s184, %s185
      %p187 = scmp.eq.s32.totalorder %s186, 0
      %s189 = sadd.s32 %s188, 1
      %s190 = scalar_select %p187, %s188, %s189
      %p193 = pneg %p187
      %p194 = scmp.eq.s32.totalorder %s24, 1
      %p195 = por %p193, %p194
      %p196 = scmp.ne.s32.totalorder %s188, %s191
      %p197 = scmp.eq.s32.totalorder %s24, 0
      %p198 = por %p196, %p197
      %p199 = scmp.ne.s32.totalorder %s188, %s191
      %p200 = scmp.eq.s32.totalorder %s29, 1
      %p201 = por %p199, %p200
      %p202 = scmp.ne.s32.totalorder %s191, %s192
      %p203 = scmp.eq.s32.totalorder %s29, 0
      %p204 = por %p202, %p203
      %p205 = scmp.ne.s32.totalorder %s191, %s192
      %p206 = scmp.eq.s32.totalorder %s30, 1
      %p207 = por %p205, %p206
      %p209 = scmp.ne.s32.totalorder %s192, %s208
      %p210 = scmp.eq.s32.totalorder %s30, 0
      %p211 = por %p209, %p210
      %p212 = scmp.le.s32.totalorder 1, %s24
      %p213 = scmp.lt.s32.totalorder %s24, 3
      %p214 = pnand %p212, %p213
      %p215 = pneg %p214
      // Predicated region
      $region9: #{tpu_custom_call.1} parent=5 // pred_check
        _
      $region10: #{tpu_custom_call.1} parent=5 // pred_check_branch
        %217 = sbr.rel (%p214) target = $region12
      $region11: #{tpu_custom_call.1} parent=5 // pred_region
        %s218 = ssub.s32 %s24, 1
        // Predicated region
        $region13: #{tpu_custom_call.1} parent=11 // pred_check
          %p219 = pneg %p85
        $region14: #{tpu_custom_call.1} parent=11 // pred_check_branch
          %221 = sbr.rel (%p219) target = $region16
        $region15: #{tpu_custom_call.1} parent=11 // pred_region
          %s223 = ssub.s32 1024, 1024
          %224 = vsyncadd [#allocation6], %s223
          %s225 = sshll.u32 [#allocation5], 4
          %s226 = int_to_ptr.vmem [resolvable:$true] %s225
          %231 = dma.hbm_to_vmem [thread:$0]  %s1, 1024, %s226, [#allocation6], 128, 128, 8
        $region16: #{tpu_custom_call.1} parent=11 // pred_fallthru
          _
        // Predicated region
        $region17: #{tpu_custom_call.1} parent=11 // pred_check
          %p232 = pneg %p106
        $region18: #{tpu_custom_call.1} parent=11 // pred_check_branch
          %234 = sbr.rel (%p232) target = $region20
        $region19: #{tpu_custom_call.1} parent=11 // pred_region
          %s236 = ssub.s32 32, 32
          %237 = vsyncadd [#allocation6], %s236
          %s238 = sshll.u32 [#allocation7], 4
          %s239 = int_to_ptr.vmem [resolvable:$true] %s238
          %244 = dma.hbm_to_vmem [thread:$0]  %s2, 32, %s239, [#allocation6], 16, 16, 1
        $region20: #{tpu_custom_call.1} parent=11 // pred_fallthru
          _
        // Predicated region
        $region21: #{tpu_custom_call.1} parent=11 // pred_check
          %p245 = pneg %p127
        $region22: #{tpu_custom_call.1} parent=11 // pred_check_branch
          %247 = sbr.rel (%p245) target = $region24
        $region23: #{tpu_custom_call.1} parent=11 // pred_region
          %s249 = ssub.s32 1024, 1024
          %250 = vsyncadd [#allocation9], %s249
          %s251 = sshll.u32 [#allocation8], 4
          %s252 = int_to_ptr.vmem [resolvable:$true] %s251
          %257 = dma.hbm_to_vmem [thread:$0]  %s3, 1024, %s252, [#allocation9], 128, 128, 8
        $region24: #{tpu_custom_call.1} parent=11 // pred_fallthru
          _
        // Predicated region
        $region25: #{tpu_custom_call.1} parent=11 // pred_check
          %p258 = pneg %p148
        $region26: #{tpu_custom_call.1} parent=11 // pred_check_branch
          %260 = sbr.rel (%p258) target = $region28
        $region27: #{tpu_custom_call.1} parent=11 // pred_region
          %s262 = ssub.s32 32, 32
          %263 = vsyncadd [#allocation9], %s262
          %s264 = sshll.u32 [#allocation10], 4
          %s265 = int_to_ptr.vmem [resolvable:$true] %s264
          %270 = dma.hbm_to_vmem [thread:$0]  %s4, 32, %s265, [#allocation9], 16, 16, 1
        $region28: #{tpu_custom_call.1} parent=11 // pred_fallthru
          _
      $region12: #{tpu_custom_call.1} parent=5 // pred_fallthru
        _
      %p271 = scmp.lt.s32.totalorder %s24, 2
      // Predicated region
      $region29: #{tpu_custom_call.1} parent=5 // pred_check
        %p272 = pneg %p271
      $region30: #{tpu_custom_call.1} parent=5 // pred_check_branch
        %274 = sbr.rel (%p272) target = $region32
      $region31: #{tpu_custom_call.1} parent=5 // pred_region
        // Predicated region
        $region33: #{tpu_custom_call.1} parent=31 // pred_check
          %p275 = pneg %p58
        $region34: #{tpu_custom_call.1} parent=31 // pred_check_branch
          %277 = sbr.rel (%p275) target = $region36
        $region35: #{tpu_custom_call.1} parent=31 // pred_region
          %s278 = sand.u32 %s48, 1
          %s279 = scalar_lea.sflag [#allocation3], %s278
          %s280 = sand.u32 %s48, 1
          %s281 = smul.addr %s280, 8
          %s282 = scalar_lea.vmem [#allocation2], %s281
          %s284 = ssub.s32 128, 128
          %285 = vsyncadd %s279, %s284
          %s286 = sadd.s32 %s32, %s31
          %s287 = smul.addr %s286, 128
          %s288 = scalar_lea.hbm %s0, %s287
          %s290 = sshll.u32 %s282, 4
          %s291 = int_to_ptr.vmem [resolvable:$true] %s290
          %293 = dma.hbm_to_vmem [thread:$0]  %s288, 128, %s291, %s279
        $region36: #{tpu_custom_call.1} parent=31 // pred_fallthru
          _
      $region32: #{tpu_custom_call.1} parent=5 // pred_fallthru
        _
      %p294 = scmp.le.s32.totalorder 1, %s24
      %p295 = scmp.lt.s32.totalorder %s24, 3
      %p296 = pnand %p294, %p295
      %p297 = pneg %p296
      // Predicated region
      $region37: #{tpu_custom_call.1} parent=5 // pred_check
        _
      $region38: #{tpu_custom_call.1} parent=5 // pred_check_branch
        %299 = sbr.rel (%p296) target = $region40
      $region39: #{tpu_custom_call.1} parent=5 // pred_region
        %s300 = ssub.s32 %s24, 1
        %s301 = sand.u32 %s51, 1
        %s302 = scalar_lea.sflag [#allocation3], %s301
        %s303 = sand.u32 %s51, 1
        %s304 = smul.addr %s303, 8
        %s305 = scalar_lea.vmem [#allocation2], %s304
        // Predicated region
        $region41: #{tpu_custom_call.1} parent=39 // pred_check
          %p306 = pneg %p64
        $region42: #{tpu_custom_call.1} parent=39 // pred_check_branch
          %308 = sbr.rel (%p306) target = $region44
        $region43: #{tpu_custom_call.1} parent=39 // pred_region
          %309 = dma.done %s302, 128
        $region44: #{tpu_custom_call.1} parent=39 // pred_fallthru
          _
        // Predicated region
        $region45: #{tpu_custom_call.1} parent=39 // pred_check
          %p310 = pneg %p85
        $region46: #{tpu_custom_call.1} parent=39 // pred_check_branch
          %312 = sbr.rel (%p310) target = $region48
        $region47: #{tpu_custom_call.1} parent=39 // pred_region
          %313 = dma.done [#allocation6], 1024
        $region48: #{tpu_custom_call.1} parent=39 // pred_fallthru
          _
        // Predicated region
        $region49: #{tpu_custom_call.1} parent=39 // pred_check
          %p314 = pneg %p106
        $region50: #{tpu_custom_call.1} parent=39 // pred_check_branch
          %316 = sbr.rel (%p314) target = $region52
        $region51: #{tpu_custom_call.1} parent=39 // pred_region
          %317 = dma.done [#allocation6], 32
        $region52: #{tpu_custom_call.1} parent=39 // pred_fallthru
          _
        // Predicated region
        $region53: #{tpu_custom_call.1} parent=39 // pred_check
          %p318 = pneg %p127
        $region54: #{tpu_custom_call.1} parent=39 // pred_check_branch
          %320 = sbr.rel (%p318) target = $region56
        $region55: #{tpu_custom_call.1} parent=39 // pred_region
          %321 = dma.done [#allocation9], 1024
        $region56: #{tpu_custom_call.1} parent=39 // pred_fallthru
          _
        // Predicated region
        $region57: #{tpu_custom_call.1} parent=39 // pred_check
          %p322 = pneg %p148
        $region58: #{tpu_custom_call.1} parent=39 // pred_check_branch
          %324 = sbr.rel (%p322) target = $region60
        $region59: #{tpu_custom_call.1} parent=39 // pred_region
          %325 = dma.done [#allocation9], 32
        $region60: #{tpu_custom_call.1} parent=39 // pred_fallthru
          _
        %s326 = sand.u32 %s51, 1
        %s327 = scalar_lea.sflag [#allocation3], %s326
        %s328 = sand.u32 %s51, 1
        %s329 = smul.addr %s328, 8
        %s330 = scalar_lea.vmem [#allocation2], %s329
        %p331 = pneg %p64
        %p332 = pneg %p61
        %p333 = pneg %p85
        %p334 = pneg %p82
        %p335 = pneg %p106
        %p336 = pneg %p103
        %p337 = pneg %p127
        %p338 = pneg %p124
        %p339 = pneg %p148
        %p340 = pneg %p145
        %p341 = pneg %p176
        %p342 = pneg %p173
        %s343 = sand.u32 %s163, 1
        %s344 = scalar_lea.sflag [#allocation4], %s343
        %s345 = sand.u32 %s163, 1
        %s346 = smul.addr %s345, 16
        %s347 = scalar_lea.vmem [#allocation11], %s346
        %p348 = pneg %p204
        %p349 = pneg %p201
        %s350 = sand.u32 %s191, 1
        %s351 = scalar_lea.sflag [#allocation13], %s350
        %s352 = sand.u32 %s191, 1
        %s353 = smul.addr %s352, 16
        %s354 = scalar_lea.vmem [#allocation12], %s353
        %v355 = vld [vmem:[%s305] sm:$0xff]
        %v356 = vld [vmem:[#allocation5] sm:$0xff]
        %v357 = vld [vmem:[#allocation5 + $0x8] sm:$0xff]
        %v358 = vld [vmem:[#allocation5 + $0x10] sm:$0xff]
        %v359 = vld [vmem:[#allocation5 + $0x18] sm:$0xff]
        %v360 = vld [vmem:[#allocation7] sm:$0x1]
        %v362 = vlaneseq
        %v363 = vshrl.u32 %v362, 7
        %v364 = vsub.s32 0, %v363
        %v365 = vrot.slane %v360, %v364
        %vm367 = vcmask 261120
        %v369 = vsel %vm367, %v355, 0
        %371 = vmatprep.subr.mxu0 0.0
        %372 = vmatpush1.msra.mxu0 %v356
        %373 = vmatprep.subr.mxu0 0.0
        %374 = vmatpush1.msra.mxu0 %v357
        %375 = vmatprep.subr.mxu0 0.0
        %376 = vmatpush1.msra.mxu0 %v358
        %377 = vmatprep.subr.mxu0 0.0
        %378 = vmatpush1.msra.mxu0 %v359
        %379 = vmatprep.subr.mxu0 0.0
        %380 = vmatpush1.msra.mxu0 0.0
        %381 = vmatprep.subr.mxu0 0.0
        %382 = vmatpush1.msra.mxu0 0.0
        %383 = vmatprep.subr.mxu0 0.0
        %384 = vmatpush1.msra.mxu0 0.0
        %385 = vmatprep.subr.mxu0 0.0
        %386 = vmatpush1.msra.mxu0 0.0
        %387 = vmatprep.subr.mxu0 0.0
        %388 = vmatpush1.msra.mxu0 0.0
        %389 = vmatprep.subr.mxu0 0.0
        %390 = vmatpush1.msra.mxu0 0.0
        %391 = vmatprep.subr.mxu0 0.0
        %392 = vmatpush1.msra.mxu0 0.0
        %393 = vmatprep.subr.mxu0 0.0
        %394 = vmatpush1.msra.mxu0 0.0
        %395 = vmatprep.subr.mxu0 0.0
        %396 = vmatpush1.msra.mxu0 0.0
        %397 = vmatprep.subr.mxu0 0.0
        %398 = vmatpush1.msra.mxu0 0.0
        %399 = vmatprep.subr.mxu0 0.0
        %400 = vmatpush1.msra.mxu0 0.0
        %401 = vmatprep.subr.mxu0 0.0
        %402 = vmatpush1.msra.mxu0 0.0
        %403 = vmatprep.subr.mxu0 0.0
        %404 = vmatpush1.msra.mxu0 0.0
        %405 = vmatprep.subr.mxu0 0.0
        %406 = vmatpush1.msra.mxu0 0.0
        %407 = vmatprep.subr.mxu0 0.0
        %408 = vmatpush1.msra.mxu0 0.0
        %409 = vmatprep.subr.mxu0 0.0
        %410 = vmatpush1.msra.mxu0 0.0
        %411 = vmatprep.subr.mxu0 0.0
        %412 = vmatpush1.msra.mxu0 0.0
        %413 = vmatprep.subr.mxu0 0.0
        %414 = vmatpush1.msra.mxu0 0.0
        %415 = vmatprep.subr.mxu0 0.0
        %416 = vmatpush1.msra.mxu0 0.0
        %417 = vmatprep.subr.mxu0 0.0
        %418 = vmatpush1.msra.mxu0 0.0
        %419 = vmatprep.subr.mxu0 0.0
        %420 = vmatpush1.msra.mxu0 0.0
        %421 = vmatprep.subr.mxu0 0.0
        %422 = vmatpush1.msra.mxu0 0.0
        %423 = vmatprep.subr.mxu0 0.0
        %424 = vmatpush1.msra.mxu0 0.0
        %425 = vmatprep.subr.mxu0 0.0
        %426 = vmatpush1.msra.mxu0 0.0
        %427 = vmatprep.subr.mxu0 0.0
        %428 = vmatpush1.msra.mxu0 0.0
        %429 = vmatprep.subr.mxu0 0.0
        %430 = vmatpush1.msra.mxu0 0.0
        %431 = vmatprep.subr.mxu0 0.0
        %432 = vmatpush1.msra.mxu0 0.0
        %433 = vmatprep.subr.mxu0 0.0
        %434 = vmatpush1.msra.mxu0 0.0
        %435 = vmatprep.mubr.f32.mxu0 0.0
        %436 = vmatmul.mubr.f32.gmra.mrb[0].mxu0 %v369
        %v437 = vpop.f32.mrb[0].mxu0
        %v438 = vadd.f32 %v365, %v437
        %v439 = vpop.f32.mrb[0].mxu0
        %440 = vdwg.mxu0
        %v441 = vld [vmem:[#allocation8] sm:$0xff]
        %v442 = vld [vmem:[#allocation8 + $0x8] sm:$0xff]
        %v443 = vld [vmem:[#allocation8 + $0x10] sm:$0xff]
        %v444 = vld [vmem:[#allocation8 + $0x18] sm:$0xff]
        %v445 = vld [vmem:[#allocation10] sm:$0x1]
        %v447 = vlaneseq
        %v448 = vshrl.u32 %v447, 7
        %v449 = vsub.s32 0, %v448
        %v450 = vrot.slane %v445, %v449
        %452 = vmatprep.subr.mxu0 0.0
        %453 = vmatpush1.msra.mxu0 %v441
        %454 = vmatprep.subr.mxu0 0.0
        %455 = vmatpush1.msra.mxu0 %v442
        %456 = vmatprep.subr.mxu0 0.0
        %457 = vmatpush1.msra.mxu0 %v443
        %458 = vmatprep.subr.mxu0 0.0
        %459 = vmatpush1.msra.mxu0 %v444
        %460 = vmatprep.subr.mxu0 0.0
        %461 = vmatpush1.msra.mxu0 0.0
        %462 = vmatprep.subr.mxu0 0.0
        %463 = vmatpush1.msra.mxu0 0.0
        %464 = vmatprep.subr.mxu0 0.0
        %465 = vmatpush1.msra.mxu0 0.0
        %466 = vmatprep.subr.mxu0 0.0
        %467 = vmatpush1.msra.mxu0 0.0
        %468 = vmatprep.subr.mxu0 0.0
        %469 = vmatpush1.msra.mxu0 0.0
        %470 = vmatprep.subr.mxu0 0.0
        %471 = vmatpush1.msra.mxu0 0.0
        %472 = vmatprep.subr.mxu0 0.0
        %473 = vmatpush1.msra.mxu0 0.0
        %474 = vmatprep.subr.mxu0 0.0
        %475 = vmatpush1.msra.mxu0 0.0
        %476 = vmatprep.subr.mxu0 0.0
        %477 = vmatpush1.msra.mxu0 0.0
        %478 = vmatprep.subr.mxu0 0.0
        %479 = vmatpush1.msra.mxu0 0.0
        %480 = vmatprep.subr.mxu0 0.0
        %481 = vmatpush1.msra.mxu0 0.0
        %482 = vmatprep.subr.mxu0 0.0
        %483 = vmatpush1.msra.mxu0 0.0
        %484 = vmatprep.subr.mxu0 0.0
        %485 = vmatpush1.msra.mxu0 0.0
        %486 = vmatprep.subr.mxu0 0.0
        %487 = vmatpush1.msra.mxu0 0.0
        %488 = vmatprep.subr.mxu0 0.0
        %489 = vmatpush1.msra.mxu0 0.0
        %490 = vmatprep.subr.mxu0 0.0
        %491 = vmatpush1.msra.mxu0 0.0
        %492 = vmatprep.subr.mxu0 0.0
        %493 = vmatpush1.msra.mxu0 0.0
        %494 = vmatprep.subr.mxu0 0.0
        %495 = vmatpush1.msra.mxu0 0.0
        %496 = vmatprep.subr.mxu0 0.0
        %497 = vmatpush1.msra.mxu0 0.0
        %498 = vmatprep.subr.mxu0 0.0
        %499 = vmatpush1.msra.mxu0 0.0
        %500 = vmatprep.subr.mxu0 0.0
        %501 = vmatpush1.msra.mxu0 0.0
        %502 = vmatprep.subr.mxu0 0.0
        %503 = vmatpush1.msra.mxu0 0.0
        %504 = vmatprep.subr.mxu0 0.0
        %505 = vmatpush1.msra.mxu0 0.0
        %506 = vmatprep.subr.mxu0 0.0
        %507 = vmatpush1.msra.mxu0 0.0
        %508 = vmatprep.subr.mxu0 0.0
        %509 = vmatpush1.msra.mxu0 0.0
        %510 = vmatprep.subr.mxu0 0.0
        %511 = vmatpush1.msra.mxu0 0.0
        %512 = vmatprep.subr.mxu0 0.0
        %513 = vmatpush1.msra.mxu0 0.0
        %514 = vmatprep.subr.mxu0 0.0
        %515 = vmatpush1.msra.mxu0 0.0
        %516 = vmatprep.mubr.f32.mxu0 0.0
        %517 = vmatmul.mubr.f32.gmra.mrb[0].mxu0 %v369
        %v518 = vpop.f32.mrb[0].mxu0
        %v519 = vadd.f32 %v450, %v518
        %v520 = vpop.f32.mrb[0].mxu0
        %521 = vdwg.mxu0
        %vm522 = vcmask 130048
        %523 = vst.msk [vmem:[%s347] sm:$0xff] %vm522, %v438
        %524 = vst.msk [vmem:[%s354] sm:$0xff] %vm522, %v519
        %s525 = scalar_lea.vmem [#allocation5], 32
        %v526 = vld [vmem:[%s525] sm:$0xff]
        %v527 = vld [vmem:[%s525 + $0x8] sm:$0xff]
        %v528 = vld [vmem:[%s525 + $0x10] sm:$0xff]
        %v529 = vld [vmem:[%s525 + $0x18] sm:$0xff]
        %s530 = scalar_lea.vmem [#allocation7], 1
        %v531 = vld [vmem:[%s530] sm:$0x1]
        %v533 = vlaneseq
        %v534 = vshrl.u32 %v533, 7
        %v535 = vsub.s32 0, %v534
        %v536 = vrot.slane %v531, %v535
        %538 = vmatprep.subr.mxu0 0.0
        %539 = vmatpush1.msra.mxu0 %v526
        %540 = vmatprep.subr.mxu0 0.0
        %541 = vmatpush1.msra.mxu0 %v527
        %542 = vmatprep.subr.mxu0 0.0
        %543 = vmatpush1.msra.mxu0 %v528
        %544 = vmatprep.subr.mxu0 0.0
        %545 = vmatpush1.msra.mxu0 %v529
        %546 = vmatprep.subr.mxu0 0.0
        %547 = vmatpush1.msra.mxu0 0.0
        %548 = vmatprep.subr.mxu0 0.0
        %549 = vmatpush1.msra.mxu0 0.0
        %550 = vmatprep.subr.mxu0 0.0
        %551 = vmatpush1.msra.mxu0 0.0
        %552 = vmatprep.subr.mxu0 0.0
        %553 = vmatpush1.msra.mxu0 0.0
        %554 = vmatprep.subr.mxu0 0.0
        %555 = vmatpush1.msra.mxu0 0.0
        %556 = vmatprep.subr.mxu0 0.0
        %557 = vmatpush1.msra.mxu0 0.0
        %558 = vmatprep.subr.mxu0 0.0
        %559 = vmatpush1.msra.mxu0 0.0
        %560 = vmatprep.subr.mxu0 0.0
        %561 = vmatpush1.msra.mxu0 0.0
        %562 = vmatprep.subr.mxu0 0.0
        %563 = vmatpush1.msra.mxu0 0.0
        %564 = vmatprep.subr.mxu0 0.0
        %565 = vmatpush1.msra.mxu0 0.0
        %566 = vmatprep.subr.mxu0 0.0
        %567 = vmatpush1.msra.mxu0 0.0
        %568 = vmatprep.subr.mxu0 0.0
        %569 = vmatpush1.msra.mxu0 0.0
        %570 = vmatprep.subr.mxu0 0.0
        %571 = vmatpush1.msra.mxu0 0.0
        %572 = vmatprep.subr.mxu0 0.0
        %573 = vmatpush1.msra.mxu0 0.0
        %574 = vmatprep.subr.mxu0 0.0
        %575 = vmatpush1.msra.mxu0 0.0
        %576 = vmatprep.subr.mxu0 0.0
        %577 = vmatpush1.msra.mxu0 0.0
        %578 = vmatprep.subr.mxu0 0.0
        %579 = vmatpush1.msra.mxu0 0.0
        %580 = vmatprep.subr.mxu0 0.0
        %581 = vmatpush1.msra.mxu0 0.0
        %582 = vmatprep.subr.mxu0 0.0
        %583 = vmatpush1.msra.mxu0 0.0
        %584 = vmatprep.subr.mxu0 0.0
        %585 = vmatpush1.msra.mxu0 0.0
        %586 = vmatprep.subr.mxu0 0.0
        %587 = vmatpush1.msra.mxu0 0.0
        %588 = vmatprep.subr.mxu0 0.0
        %589 = vmatpush1.msra.mxu0 0.0
        %590 = vmatprep.subr.mxu0 0.0
        %591 = vmatpush1.msra.mxu0 0.0
        %592 = vmatprep.subr.mxu0 0.0
        %593 = vmatpush1.msra.mxu0 0.0
        %594 = vmatprep.subr.mxu0 0.0
        %595 = vmatpush1.msra.mxu0 0.0
        %596 = vmatprep.subr.mxu0 0.0
        %597 = vmatpush1.msra.mxu0 0.0
        %598 = vmatprep.subr.mxu0 0.0
        %599 = vmatpush1.msra.mxu0 0.0
        %600 = vmatprep.subr.mxu0 0.0
        %601 = vmatpush1.msra.mxu0 0.0
        %602 = vmatprep.mubr.f32.mxu0 0.0
        %603 = vmatmul.mubr.f32.gmra.mrb[0].mxu0 %v369
        %v604 = vpop.f32.mrb[0].mxu0
        %v605 = vadd.f32 %v536, %v604
        %v606 = vpop.f32.mrb[0].mxu0
        %607 = vdwg.mxu0
        %s608 = scalar_lea.vmem [#allocation8], 32
        %v609 = vld [vmem:[%s608] sm:$0xff]
        %v610 = vld [vmem:[%s608 + $0x8] sm:$0xff]
        %v611 = vld [vmem:[%s608 + $0x10] sm:$0xff]
        %v612 = vld [vmem:[%s608 + $0x18] sm:$0xff]
        %s613 = scalar_lea.vmem [#allocation10], 1
        %v614 = vld [vmem:[%s613] sm:$0x1]
        %v616 = vlaneseq
        %v617 = vshrl.u32 %v616, 7
        %v618 = vsub.s32 0, %v617
        %v619 = vrot.slane %v614, %v618
        %621 = vmatprep.subr.mxu0 0.0
        %622 = vmatpush1.msra.mxu0 %v609
        %623 = vmatprep.subr.mxu0 0.0
        %624 = vmatpush1.msra.mxu0 %v610
        %625 = vmatprep.subr.mxu0 0.0
        %626 = vmatpush1.msra.mxu0 %v611
        %627 = vmatprep.subr.mxu0 0.0
        %628 = vmatpush1.msra.mxu0 %v612
        %629 = vmatprep.subr.mxu0 0.0
        %630 = vmatpush1.msra.mxu0 0.0
        %631 = vmatprep.subr.mxu0 0.0
        %632 = vmatpush1.msra.mxu0 0.0
        %633 = vmatprep.subr.mxu0 0.0
        %634 = vmatpush1.msra.mxu0 0.0
        %635 = vmatprep.subr.mxu0 0.0
        %636 = vmatpush1.msra.mxu0 0.0
        %637 = vmatprep.subr.mxu0 0.0
        %638 = vmatpush1.msra.mxu0 0.0
        %639 = vmatprep.subr.mxu0 0.0
        %640 = vmatpush1.msra.mxu0 0.0
        %641 = vmatprep.subr.mxu0 0.0
        %642 = vmatpush1.msra.mxu0 0.0
        %643 = vmatprep.subr.mxu0 0.0
        %644 = vmatpush1.msra.mxu0 0.0
        %645 = vmatprep.subr.mxu0 0.0
        %646 = vmatpush1.msra.mxu0 0.0
        %647 = vmatprep.subr.mxu0 0.0
        %648 = vmatpush1.msra.mxu0 0.0
        %649 = vmatprep.subr.mxu0 0.0
        %650 = vmatpush1.msra.mxu0 0.0
        %651 = vmatprep.subr.mxu0 0.0
        %652 = vmatpush1.msra.mxu0 0.0
        %653 = vmatprep.subr.mxu0 0.0
        %654 = vmatpush1.msra.mxu0 0.0
        %655 = vmatprep.subr.mxu0 0.0
        %656 = vmatpush1.msra.mxu0 0.0
        %657 = vmatprep.subr.mxu0 0.0
        %658 = vmatpush1.msra.mxu0 0.0
        %659 = vmatprep.subr.mxu0 0.0
        %660 = vmatpush1.msra.mxu0 0.0
        %661 = vmatprep.subr.mxu0 0.0
        %662 = vmatpush1.msra.mxu0 0.0
        %663 = vmatprep.subr.mxu0 0.0
        %664 = vmatpush1.msra.mxu0 0.0
        %665 = vmatprep.subr.mxu0 0.0
        %666 = vmatpush1.msra.mxu0 0.0
        %667 = vmatprep.subr.mxu0 0.0
        %668 = vmatpush1.msra.mxu0 0.0
        %669 = vmatprep.subr.mxu0 0.0
        %670 = vmatpush1.msra.mxu0 0.0
        %671 = vmatprep.subr.mxu0 0.0
        %672 = vmatpush1.msra.mxu0 0.0
        %673 = vmatprep.subr.mxu0 0.0
        %674 = vmatpush1.msra.mxu0 0.0
        %675 = vmatprep.subr.mxu0 0.0
        %676 = vmatpush1.msra.mxu0 0.0
        %677 = vmatprep.subr.mxu0 0.0
        %678 = vmatpush1.msra.mxu0 0.0
        %679 = vmatprep.subr.mxu0 0.0
        %680 = vmatpush1.msra.mxu0 0.0
        %681 = vmatprep.subr.mxu0 0.0
        %682 = vmatpush1.msra.mxu0 0.0
        %683 = vmatprep.subr.mxu0 0.0
        %684 = vmatpush1.msra.mxu0 0.0
        %685 = vmatprep.mubr.f32.mxu0 0.0
        %686 = vmatmul.mubr.f32.gmra.mrb[0].mxu0 %v369
        %v687 = vpop.f32.mrb[0].mxu0
        %v688 = vadd.f32 %v619, %v687
        %v689 = vpop.f32.mrb[0].mxu0
        %690 = vdwg.mxu0
        %s691 = scalar_lea.vmem %s347, 8 [#allocation11]
        %692 = vst.msk [vmem:[%s691] sm:$0xff] %vm522, %v605
        %s693 = scalar_lea.vmem %s354, 8 [#allocation12]
        %694 = vst.msk [vmem:[%s693] sm:$0xff] %vm522, %v688
        %s695 = sand.u32 %s163, 1
        %s696 = scalar_lea.sflag [#allocation4], %s695
        %s697 = sand.u32 %s163, 1
        %s698 = smul.addr %s697, 16
        %s699 = scalar_lea.vmem [#allocation11], %s698
        %s700 = sand.u32 %s191, 1
        %s701 = scalar_lea.sflag [#allocation13], %s700
        %s702 = sand.u32 %s191, 1
        %s703 = smul.addr %s702, 16
        %s704 = scalar_lea.vmem [#allocation12], %s703
        // Predicated region
        $region61: #{tpu_custom_call.1} parent=39 // pred_check
          %p705 = pneg %p173
        $region62: #{tpu_custom_call.1} parent=39 // pred_check_branch
          %707 = sbr.rel (%p705) target = $region64
        $region63: #{tpu_custom_call.1} parent=39 // pred_region
          %s709 = ssub.s32 256, 256
          %710 = vsyncadd %s696, %s709
          %s711 = smul.addr %s33, 2
          %s712 = sadd.s32 %s34, %s711
          %s713 = smul.addr %s712, 128
          %s714 = scalar_lea.hbm %s5, %s713
          %s715 = sshll.u32 %s699, 4
          %s716 = int_to_ptr.vmem [resolvable:$true] %s715
          %721 = dma.vmem_to_hbm [thread:$0]  %s716, 256, %s714, %s696, 128, 128, 8
        $region64: #{tpu_custom_call.1} parent=39 // pred_fallthru
          _
        // Predicated region
        $region65: #{tpu_custom_call.1} parent=39 // pred_check
          %p722 = pneg %p201
        $region66: #{tpu_custom_call.1} parent=39 // pred_check_branch
          %724 = sbr.rel (%p722) target = $region68
        $region67: #{tpu_custom_call.1} parent=39 // pred_region
          %s726 = ssub.s32 256, 256
          %727 = vsyncadd %s701, %s726
          %s728 = smul.addr %s33, 2
          %s729 = sadd.s32 %s34, %s728
          %s730 = smul.addr %s729, 128
          %s731 = scalar_lea.hbm %s6, %s730
          %s732 = sshll.u32 %s704, 4
          %s733 = int_to_ptr.vmem [resolvable:$true] %s732
          %738 = dma.vmem_to_hbm [thread:$0]  %s733, 256, %s731, %s701, 128, 128, 8
        $region68: #{tpu_custom_call.1} parent=39 // pred_fallthru
          _
      $region40: #{tpu_custom_call.1} parent=5 // pred_fallthru
        _
      %p739 = scmp.le.s32.totalorder 2, %s24
      // Predicated region
      $region69: #{tpu_custom_call.1} parent=5 // pred_check
        %p740 = pneg %p739
      $region70: #{tpu_custom_call.1} parent=5 // pred_check_branch
        %742 = sbr.rel (%p740) target = $region72
      $region71: #{tpu_custom_call.1} parent=5 // pred_region
        %s743 = ssub.s32 %s24, 2
        // Predicated region
        $region73: #{tpu_custom_call.1} parent=71 // pred_check
          %p744 = pneg %p179
        $region74: #{tpu_custom_call.1} parent=71 // pred_check_branch
          %746 = sbr.rel (%p744) target = $region76
        $region75: #{tpu_custom_call.1} parent=71 // pred_region
          %s747 = sand.u32 %s164, 1
          %s748 = scalar_lea.sflag [#allocation4], %s747
          %s749 = sand.u32 %s164, 1
          %s750 = smul.addr %s749, 16
          %s751 = scalar_lea.vmem [#allocation11], %s750
          %752 = dma.done %s748, 256
        $region76: #{tpu_custom_call.1} parent=71 // pred_fallthru
          _
        // Predicated region
        $region77: #{tpu_custom_call.1} parent=71 // pred_check
          %p753 = pneg %p207
        $region78: #{tpu_custom_call.1} parent=71 // pred_check_branch
          %755 = sbr.rel (%p753) target = $region80
        $region79: #{tpu_custom_call.1} parent=71 // pred_region
          %s756 = sand.u32 %s192, 1
          %s757 = scalar_lea.sflag [#allocation13], %s756
          %s758 = sand.u32 %s192, 1
          %s759 = smul.addr %s758, 16
          %s760 = scalar_lea.vmem [#allocation12], %s759
          %761 = dma.done %s757, 256
        $region80: #{tpu_custom_call.1} parent=71 // pred_fallthru
          _
      $region72: #{tpu_custom_call.1} parent=5 // pred_fallthru
        _
    $region6: #{tpu_custom_call.1} parent=1 // loop_footer
      %s28 = sadd.s32 1, %s24
    $region7: #{tpu_custom_call.1} parent=1 // loop_footer_branch
      %23 = sbr.rel target = $region3
    $region8: #{tpu_custom_call.1} parent=1 // loop_exit
      _
    %762 = vsyncpa [#allocation3], 1
    %s763 = scalar_lea.sflag [#allocation3], 1
    %764 = vsyncpa %s763, 1
    %765 = vsyncpa [#allocation6], 1
    %766 = vsyncpa [#allocation9], 1
    %767 = vsyncpa [#allocation4], 1
    %s768 = scalar_lea.sflag [#allocation4], 1
    %769 = vsyncpa %s768, 1
    %770 = vsyncpa [#allocation13], 1
    %s771 = scalar_lea.sflag [#allocation13], 1
    %772 = vsyncpa %s771, 1

</llo_original>
